<compile_context>
chip_gen: v5e
topology: v5e:2x2
jax: 0.10.0
libtpu: 0.0.40
codegen_flags: <defaults>
</compile_context>

<pallas_src>
import functools

import jax
import jax.numpy as jnp
from jax.experimental import pallas as pl
from jax.experimental.pallas import tpu as pltpu

STATE_DIM = 2
ACTION_DIM = 3
DIN = STATE_DIM + ACTION_DIM      # 5
DIN_PAD = 8                       # sublane-aligned fc1 K dimension
HIDDEN = 128


def _round_up(x, m):
    return ((x + m - 1) // m) * m


def critic_kernel(x_ref, w1_ref, b1_ref, w2_ref, b2_ref, w3_ref, b3_ref, q_ref):
    # fc1 + relu: single small K=8 dot (cols 5..7 of x / rows 5..7 of w1 are 0).
    h1 = jnp.dot(x_ref[...], w1_ref[...],
                 preferred_element_type=jnp.float32) + b1_ref[...]
    h1 = jnp.maximum(h1, 0.0)

    # fc2 + relu: the only "real" MXU matmul (tb x 128 x 128).  Operands are
    # cast to w2's dtype (f32 or bf16); accumulation stays f32.
    h2 = jnp.dot(h1.astype(w2_ref.dtype), w2_ref[...],
                 preferred_element_type=jnp.float32) + b2_ref[...]
    h2 = jnp.maximum(h2, 0.0)

    # fc3 (N=1): VPU multiply + lane reduction against the (1, H) weight row.
    # Result is written lane-dense as a (1, 1, tb) block -> unmasked stores.
    q = jnp.sum(h2 * w3_ref[...], axis=-1) + b3_ref[0]
    q_ref[...] = jnp.reshape(q, q_ref.shape).astype(q_ref.dtype)


@functools.partial(jax.jit, static_argnames=("tile_b", "mxu_dtype"))
def critic_forward(state, action, params, tile_b=512, mxu_dtype=jnp.float32):
    """state: (B, STATE_DIM), action: (B, ACTION_DIM) -> q: (B, 1)."""
    w1, b1, w2, b2, w3, b3 = params
    B = state.shape[0]

    # Fused fc1 input: concat + zero-pad to a sublane-aligned K of 8.
    x = jnp.concatenate([state, action], axis=1).astype(jnp.float32)
    x = jnp.pad(x, ((0, 0), (0, DIN_PAD - DIN)))

    w1_p = jnp.pad(jnp.asarray(w1, jnp.float32), ((0, DIN_PAD - DIN), (0, 0)))
    b1_r = jnp.reshape(b1, (1, HIDDEN)).astype(jnp.float32)
    w2_m = jnp.asarray(w2, mxu_dtype)          # bf16 here on v6e/v7x if desired
    b2_r = jnp.reshape(b2, (1, HIDDEN)).astype(jnp.float32)
    w3_row = jnp.reshape(w3, (1, HIDDEN)).astype(jnp.float32)
    b3_s = jnp.reshape(b3, (1,)).astype(jnp.float32)     # scalar -> SMEM

    # Batch tiling: sublane-aligned, large tiles; keep >= 2 grid steps when the
    # batch allows so the "parallel" axis can shard across both v7x TCs.
    b_aligned = _round_up(B, 8)
    tb = min(tile_b, b_aligned)
    half = _round_up(pl.cdiv(b_aligned, 2), 8)
    if 8 <= half < tb:
        tb = half
    Bp = _round_up(B, tb)
    if Bp != B:
        x = jnp.pad(x, ((0, Bp - B), (0, 0)))
    nb = Bp // tb

    flops = 2 * Bp * (DIN_PAD * HIDDEN + HIDDEN * HIDDEN + HIDDEN)
    bytes_accessed = 4 * (Bp * DIN_PAD + DIN_PAD * HIDDEN + HIDDEN
                          + HIDDEN * HIDDEN + HIDDEN + HIDDEN + 1 + Bp)

    q = pl.pallas_call(
        critic_kernel,
        out_shape=jax.ShapeDtypeStruct((nb, 1, tb), jnp.float32),
        grid_spec=pl.GridSpec(
            grid=(nb,),
            in_specs=[
                # Batch-tiled fused input (pipelined across the grid).
                pl.BlockSpec((tb, DIN_PAD), lambda i: (i, 0)),
                # Weights / biases: constant block index -> VMEM-resident.
                pl.BlockSpec((DIN_PAD, HIDDEN), lambda i: (0, 0)),
                pl.BlockSpec((1, HIDDEN), lambda i: (0, 0)),
                pl.BlockSpec((HIDDEN, HIDDEN), lambda i: (0, 0)),
                pl.BlockSpec((1, HIDDEN), lambda i: (0, 0)),
                pl.BlockSpec((1, HIDDEN), lambda i: (0, 0)),
                # Scalar fc3 bias in SMEM.
                pl.BlockSpec(memory_space=pltpu.SMEM),
            ],
            # Lane-dense output block: (1, 1, tb) row per grid step.
            out_specs=pl.BlockSpec((1, 1, tb), lambda i: (i, 0, 0)),
        ),
        compiler_params=pltpu.CompilerParams(
            dimension_semantics=("parallel",)),
        cost_estimate=pl.CostEstimate(
            flops=flops, transcendentals=0, bytes_accessed=bytes_accessed),
    )(x, w1_p, b1_r, w2_m, b2_r, w3_row, b3_s)

    return q.reshape(Bp, 1)[:B]


def init_params(key):
    """Deterministic init mimicking torch.nn.Linear default (U[-1/sqrt(fan_in), +])."""
    def linear(key, fan_in, fan_out):
        kw, kb = jax.random.split(key)
        bound = 1.0 / jnp.sqrt(fan_in)
        w = jax.random.uniform(kw, (fan_in, fan_out), jnp.float32, -bound, bound)
        b = jax.random.uniform(kb, (1, fan_out), jnp.float32, -bound, bound)
        return w, b

    k1, k2, k3 = jax.random.split(key, 3)
    w1, b1 = linear(k1, STATE_DIM + ACTION_DIM, HIDDEN)
    w2, b2 = linear(k2, HIDDEN, HIDDEN)
    w3, b3 = linear(k3, HIDDEN, 1)
    return (w1, b1, w2, b2, w3, b3)


def critic_ref(state, action, params):
    """Pure-JAX reference for correctness checking."""
    w1, b1, w2, b2, w3, b3 = params
    x = jnp.concatenate([state, action], axis=1)
    h1 = jnp.maximum(x @ w1 + b1, 0.0)
    h2 = jnp.maximum(h1 @ w2 + b2, 0.0)
    return h2 @ w3 + b3


if __name__ == "__main__":
    key = jax.random.PRNGKey(0)
    kp, ks, ka, ks2, ka2, ks3, ka3 = jax.random.split(key, 7)

    params = init_params(kp)

    # Primary test (batch = 8), exact f32 parity.
    B = 8
    state = jax.random.normal(ks, (B, STATE_DIM), jnp.float32)
    action = jax.random.normal(ka, (B, ACTION_DIM), jnp.float32)
    q = jax.block_until_ready(critic_forward(state, action, params))
    q_ref = critic_ref(state, action, params)
    assert q.shape == (B, 1)
    assert jnp.allclose(q, q_ref, atol=1e-5, rtol=1e-5), (q, q_ref)

    # Padding / multi-tile path (B = 20, small forced tiles).
    B2 = 20
    state2 = jax.random.normal(ks2, (B2, STATE_DIM), jnp.float32)
    action2 = jax.random.normal(ka2, (B2, ACTION_DIM), jnp.float32)
    q2 = jax.block_until_ready(critic_forward(state2, action2, params, tile_b=8))
    q2_ref = critic_ref(state2, action2, params)
    assert q2.shape == (B2, 1)
    assert jnp.allclose(q2, q2_ref, atol=1e-5, rtol=1e-5), (q2, q2_ref)

    # bf16-MXU path for the fc2 matmul (v6e/v7x perf option) — looser tolerance.
    B3 = 64
    state3 = jax.random.normal(ks3, (B3, STATE_DIM), jnp.float32)
    action3 = jax.random.normal(ka3, (B3, ACTION_DIM), jnp.float32)
    q3 = jax.block_until_ready(
        critic_forward(state3, action3, params, mxu_dtype=jnp.bfloat16))
    q3_ref = critic_ref(state3, action3, params)
    assert q3.shape == (B3, 1)
    assert jnp.allclose(q3, q3_ref, atol=1e-1, rtol=1e-1), (q3, q3_ref)

    print("KERNEL_OK")
</pallas_src>

<mosaic_0001>
module attributes {stable_mosaic.version = 11 : i64} {
  func.func @critic_kernel(%arg0: i32, %arg1: memref<8x8xf32, #tpu.memory_space<vmem>>, %arg2: memref<8x128xf32, #tpu.memory_space<vmem>>, %arg3: memref<1x128xf32, #tpu.memory_space<vmem>>, %arg4: memref<128x128xf32, #tpu.memory_space<vmem>>, %arg5: memref<1x128xf32, #tpu.memory_space<vmem>>, %arg6: memref<1x128xf32, #tpu.memory_space<vmem>>, %arg7: memref<1xf32, #tpu.memory_space<smem>>, %arg8: memref<1x1x8xf32, #tpu.memory_space<vmem>>) attributes {dimension_semantics = [#tpu.dimension_semantics<parallel>], iteration_bounds = array<i64: 1>, scalar_prefetch = 0 : i64, scratch_operands = 0 : i64, tpu.core_type = #tpu.core_type<tc>, window_params = [{transform_indices = @transform_0, window_bounds = array<i64: 8, 8>}, {pipeline_mode = #tpu.pipeline_mode<synchronous>, transform_indices = @transform_1, window_bounds = array<i64: 8, 128>}, {pipeline_mode = #tpu.pipeline_mode<synchronous>, transform_indices = @transform_2, window_bounds = array<i64: 1, 128>}, {pipeline_mode = #tpu.pipeline_mode<synchronous>, transform_indices = @transform_3, window_bounds = array<i64: 128, 128>}, {pipeline_mode = #tpu.pipeline_mode<synchronous>, transform_indices = @transform_4, window_bounds = array<i64: 1, 128>}, {pipeline_mode = #tpu.pipeline_mode<synchronous>, transform_indices = @transform_5, window_bounds = array<i64: 1, 128>}, {transform_indices = @transform_6, window_bounds = array<i64: 1>}, {transform_indices = @transform_7, window_bounds = array<i64: 1, 1, 8>}]} {
    %c0 = arith.constant 0 : index
    %c0_0 = arith.constant 0 : index
    %0 = vector.load %arg1[%c0, %c0_0] : memref<8x8xf32, #tpu.memory_space<vmem>>, vector<8x8xf32>
    %c0_1 = arith.constant 0 : index
    %c0_2 = arith.constant 0 : index
    %1 = vector.load %arg2[%c0_1, %c0_2] : memref<8x128xf32, #tpu.memory_space<vmem>>, vector<8x128xf32>
    %cst = arith.constant dense<0.000000e+00> : vector<8x128xf32>
    %2 = tpu.matmul %0, %1, %cst {dimension_numbers = #tpu.dot_dimension_numbers<[1], [0], [0], [1], [0, 0, 1, 1], [], []>} : vector<8x8xf32>, vector<8x128xf32>, vector<8x128xf32> -> vector<8x128xf32>
    %c0_3 = arith.constant 0 : index
    %c0_4 = arith.constant 0 : index
    %3 = vector.load %arg3[%c0_3, %c0_4] : memref<1x128xf32, #tpu.memory_space<vmem>>, vector<1x128xf32>
    %4 = vector.broadcast %3 : vector<1x128xf32> to vector<8x128xf32>
    %5 = arith.addf %2, %4 : vector<8x128xf32>
    %cst_5 = arith.constant 0.000000e+00 : f32
    %6 = vector.broadcast %cst_5 : f32 to vector<8x128xf32>
    %7 = arith.maximumf %5, %6 : vector<8x128xf32>
    %c0_6 = arith.constant 0 : index
    %c0_7 = arith.constant 0 : index
    %8 = vector.load %arg4[%c0_6, %c0_7] : memref<128x128xf32, #tpu.memory_space<vmem>>, vector<128x128xf32>
    %cst_8 = arith.constant dense<0.000000e+00> : vector<8x128xf32>
    %9 = tpu.matmul %7, %8, %cst_8 {dimension_numbers = #tpu.dot_dimension_numbers<[1], [0], [0], [1], [0, 0, 1, 1], [], []>} : vector<8x128xf32>, vector<128x128xf32>, vector<8x128xf32> -> vector<8x128xf32>
    %c0_9 = arith.constant 0 : index
    %c0_10 = arith.constant 0 : index
    %10 = vector.load %arg5[%c0_9, %c0_10] : memref<1x128xf32, #tpu.memory_space<vmem>>, vector<1x128xf32>
    %11 = vector.broadcast %10 : vector<1x128xf32> to vector<8x128xf32>
    %12 = arith.addf %9, %11 : vector<8x128xf32>
    %cst_11 = arith.constant 0.000000e+00 : f32
    %13 = vector.broadcast %cst_11 : f32 to vector<8x128xf32>
    %14 = arith.maximumf %12, %13 : vector<8x128xf32>
    %c0_12 = arith.constant 0 : index
    %c0_13 = arith.constant 0 : index
    %15 = vector.load %arg6[%c0_12, %c0_13] : memref<1x128xf32, #tpu.memory_space<vmem>>, vector<1x128xf32>
    %16 = vector.broadcast %15 : vector<1x128xf32> to vector<8x128xf32>
    %17 = arith.mulf %14, %16 : vector<8x128xf32>
    %cst_14 = arith.constant dense<0.000000e+00> : vector<8xf32>
    %18 = vector.multi_reduction <add>, %17, %cst_14 [1] : vector<8x128xf32> to vector<8xf32>
    %c0_15 = arith.constant 0 : index
    %19 = memref.load %arg7[%c0_15] : memref<1xf32, #tpu.memory_space<smem>>
    %20 = vector.broadcast %19 : f32 to vector<8xf32>
    %21 = arith.addf %18, %20 : vector<8xf32>
    %22 = vector.shape_cast %21 : vector<8xf32> to vector<1x1x8xf32>
    %c0_16 = arith.constant 0 : index
    %c0_17 = arith.constant 0 : index
    %c0_18 = arith.constant 0 : index
    %23 = vector.load %arg8[%c0_16, %c0_17, %c0_18] : memref<1x1x8xf32, #tpu.memory_space<vmem>>, vector<1x1x8xf32>
    tpu.vector_store %arg8[%c0_16, %c0_17, %c0_18], %22 {strides = array<i32>} : memref<1x1x8xf32, #tpu.memory_space<vmem>>, vector<1x1x8xf32>,
    return
  }
  func.func @transform_0(%arg0: i32) -> (i32, i32) {
    %c0_i32 = arith.constant 0 : i32
    %c0_i32_0 = arith.constant 0 : i32
    return %arg0, %c0_i32 : i32, i32
  }
  func.func @transform_1(%arg0: i32) -> (i32, i32) {
    %c0_i32 = arith.constant 0 : i32
    %c0_i32_0 = arith.constant 0 : i32
    %c0_i32_1 = arith.constant 0 : i32
    return %c0_i32, %c0_i32_0 : i32, i32
  }
  func.func @transform_2(%arg0: i32) -> (i32, i32) {
    %c0_i32 = arith.constant 0 : i32
    %c0_i32_0 = arith.constant 0 : i32
    %c0_i32_1 = arith.constant 0 : i32
    return %c0_i32, %c0_i32_0 : i32, i32
  }
  func.func @transform_3(%arg0: i32) -> (i32, i32) {
    %c0_i32 = arith.constant 0 : i32
    %c0_i32_0 = arith.constant 0 : i32
    %c0_i32_1 = arith.constant 0 : i32
    return %c0_i32, %c0_i32_0 : i32, i32
  }
  func.func @transform_4(%arg0: i32) -> (i32, i32) {
    %c0_i32 = arith.constant 0 : i32
    %c0_i32_0 = arith.constant 0 : i32
    %c0_i32_1 = arith.constant 0 : i32
    return %c0_i32, %c0_i32_0 : i32, i32
  }
  func.func @transform_5(%arg0: i32) -> (i32, i32) {
    %c0_i32 = arith.constant 0 : i32
    %c0_i32_0 = arith.constant 0 : i32
    %c0_i32_1 = arith.constant 0 : i32
    return %c0_i32, %c0_i32_0 : i32, i32
  }
  func.func @transform_6(%arg0: i32) -> i32 {
    %c0_i32 = arith.constant 0 : i32
    %c0_i32_0 = arith.constant 0 : i32
    return %c0_i32 : i32
  }
  func.func @transform_7(%arg0: i32) -> (i32, i32, i32) {
    %c0_i32 = arith.constant 0 : i32
    %c0_i32_0 = arith.constant 0 : i32
    %c0_i32_1 = arith.constant 0 : i32
    return %arg0, %c0_i32, %c0_i32_0 : i32, i32, i32
  }
}

</mosaic_0001>

<llo_original>
// kernel: critic_forward.1
$region0: #{critic_forward.1}
  #allocation0 [shape = 'u32[]', space=smem, size = 0x4, offset = 0x4, fixed_abs, tag = 'smem constant byte address 0x4 - core index']
  #allocation1 [shape = 'u32[72,128]{1,0:T(1,128)}', space=vmem, size = 0x9000, scoped, tag = 'internal scratch']
  #allocation2 [shape = 'f32[1]{0:T(128)S(6)}', space=smem, size = 0x200, scoped, tag = 'scoped memory for critic_forward.1']
  %s0 = inlined_call_operand.vmem [shape: f32[8,8], index: 0, kind: input, shape index: {}]
  %s1 = inlined_call_operand.vmem [shape: f32[8,128], index: 1, kind: input, shape index: {}]
  %s2 = inlined_call_operand.vmem [shape: f32[1,128], index: 2, kind: input, shape index: {}]
  %s3 = inlined_call_operand.hbm [shape: f32[128,128], index: 3, kind: input, shape index: {}]
  %s4 = inlined_call_operand.vmem [shape: f32[1,128], index: 4, kind: input, shape index: {}]
  %s5 = inlined_call_operand.vmem [shape: f32[1,128], index: 5, kind: input, shape index: {}]
  %s6 = inlined_call_operand.<no memory space> [shape: f32[1], index: 6, kind: input, shape index: {}]
  %s7 = inlined_call_operand.hbm [shape: f32[1,1,8], index: 7, kind: output, shape index: {}]
  %s8 = sld [smem:[#allocation0]]
  $region42: #{critic_forward.1} parent=0
    _
  %s10 = ssub.s32 1, %s8
  %s11 = scalar_select 0, %s10, %s8
  %12 = sst [smem:[#allocation2]] %s6
  $region1: #{critic_forward.1} parent=0
    #allocation3 [shape = 'u8[65536]{0}', space=vmem, size = 0x10000, scoped, tag = 'input window, operand 3, single buffered']
    #allocation4 [shape = 's32[1]{0}', space=sflag, size = 0x4, scoped, tag = 'scoped memory for critic_forward.1']
    #allocation5 [shape = 's32[1]{0}', space=sflag, size = 0x4, scoped, tag = 'scoped memory for critic_forward.1']
    #allocation6 [shape = 'u8[512]{0}', space=vmem, size = 0x400, scoped, tag = 'output window, operand 0, single buffered']
    %13 = vsyncpa [#allocation4], 0
    %14 = vsyncpa [#allocation5], 0
    // Predicated region
    $region2: #{critic_forward.1} parent=1 // pred_check
      _
    $region3: #{critic_forward.1} parent=1 // pred_check_branch
      %16 = sbr.rel (0) target = $region5
    $region4: #{critic_forward.1} parent=1 // pred_region
      _
    $region5: #{critic_forward.1} parent=1 // pred_fallthru
      _
    // Predicated region
    $region6: #{critic_forward.1} parent=1 // pred_check
      _
    $region7: #{critic_forward.1} parent=1 // pred_check_branch
      %18 = sbr.rel (0) target = $region9
    $region8: #{critic_forward.1} parent=1 // pred_region
      _
    $region9: #{critic_forward.1} parent=1 // pred_fallthru
      _
    // Predicated region
    $region10: #{critic_forward.1} parent=1 // pred_check
      _
    $region11: #{critic_forward.1} parent=1 // pred_check_branch
      %20 = sbr.rel (0) target = $region13
    $region12: #{critic_forward.1} parent=1 // pred_region
      _
    $region13: #{critic_forward.1} parent=1 // pred_fallthru
      _
    // Predicated region
    $region14: #{critic_forward.1} parent=1 // pred_check
      _
    $region15: #{critic_forward.1} parent=1 // pred_check_branch
      %22 = sbr.rel (0) target = $region17
    $region16: #{critic_forward.1} parent=1 // pred_region
      %24 = vsyncadd [#allocation4], 0
      %s25 = sshll.u32 %s3, 4
      %s26 = int_to_ptr.hbm [resolvable:$true] %s25
      %s27 = sshll.u32 [#allocation3], 4
      %s28 = int_to_ptr.vmem [resolvable:$true] %s27
      %33 = dma.hbm_to_vmem [thread:$0]  %s26, 2048, %s28, [#allocation4], 128, 128, 8
    $region17: #{critic_forward.1} parent=1 // pred_fallthru
      _
    // Predicated region
    $region18: #{critic_forward.1} parent=1 // pred_check
      _
    $region19: #{critic_forward.1} parent=1 // pred_check_branch
      %35 = sbr.rel (0) target = $region21
    $region20: #{critic_forward.1} parent=1 // pred_region
      _
    $region21: #{critic_forward.1} parent=1 // pred_fallthru
      _
    // Predicated region
    $region22: #{critic_forward.1} parent=1 // pred_check
      _
    $region23: #{critic_forward.1} parent=1 // pred_check_branch
      %37 = sbr.rel (0) target = $region25
    $region24: #{critic_forward.1} parent=1 // pred_region
      _
    $region25: #{critic_forward.1} parent=1 // pred_fallthru
      _
    // Predicated region
    $region26: #{critic_forward.1} parent=1 // pred_check
      _
    $region27: #{critic_forward.1} parent=1 // pred_check_branch
      %39 = sbr.rel (0) target = $region29
    $region28: #{critic_forward.1} parent=1 // pred_region
      _
    $region29: #{critic_forward.1} parent=1 // pred_fallthru
      _
    // Predicated region
    $region30: #{critic_forward.1} parent=1 // pred_check
      _
    $region31: #{critic_forward.1} parent=1 // pred_check_branch
      %41 = sbr.rel (0) target = $region33
    $region32: #{critic_forward.1} parent=1 // pred_region
      %43 = dma.done [#allocation4], 2048
    $region33: #{critic_forward.1} parent=1 // pred_fallthru
      _
    %v44 = vld [vmem:[%s0] sm:$0xff]
    %v45 = vld [vmem:[%s1] sm:$0xff]
    %v46 = vld [vmem:[%s2] sm:$0x1]
    %v48 = vperm.slane %v46, 0
    %vm50 = vcmask 64512
    %v52 = vsel %vm50, %v44, 0
    %54 = vmatpush.msra.mxu0 0.0
    %55 = vmatpush.msra.mxu0 0.0
    %56 = vmatpush.msra.mxu0 0.0
    %57 = vmatpush.msra.mxu0 0.0
    %58 = vmatpush.msra.mxu0 0.0
    %59 = vmatpush.msra.mxu0 0.0
    %60 = vmatpush.msra.mxu0 0.0
    %61 = vmatpush.msra.mxu0 0.0
    %62 = vmatpush.msra.mxu0 0.0
    %63 = vmatpush.msra.mxu0 0.0
    %64 = vmatpush.msra.mxu0 0.0
    %65 = vmatpush.msra.mxu0 0.0
    %66 = vmatpush.msra.mxu0 0.0
    %67 = vmatpush.msra.mxu0 0.0
    %68 = vmatpush.msra.mxu0 0.0
    %69 = vmatpush.msra.mxu0 %v45
    %70 = vmatmul.f32.gmra.mxu0 %v52
    %v71 = vpop.f32.mrf.mxu0
    %v72 = vadd.f32 %v48, %v71
    %73 = vdwg.mxu0
    %v74 = vmax.f32 %v72, 0.0
    %v75 = vld [vmem:[#allocation3] sm:$0xff]
    %v76 = vld [vmem:[#allocation3 + $0x8] sm:$0xff]
    %v77 = vld [vmem:[#allocation3 + $0x10] sm:$0xff]
    %v78 = vld [vmem:[#allocation3 + $0x18] sm:$0xff]
    %v79 = vld [vmem:[#allocation3 + $0x20] sm:$0xff]
    %v80 = vld [vmem:[#allocation3 + $0x28] sm:$0xff]
    %v81 = vld [vmem:[#allocation3 + $0x30] sm:$0xff]
    %v82 = vld [vmem:[#allocation3 + $0x38] sm:$0xff]
    %v83 = vld [vmem:[#allocation3 + $0x40] sm:$0xff]
    %v84 = vld [vmem:[#allocation3 + $0x48] sm:$0xff]
    %v85 = vld [vmem:[#allocation3 + $0x50] sm:$0xff]
    %v86 = vld [vmem:[#allocation3 + $0x58] sm:$0xff]
    %v87 = vld [vmem:[#allocation3 + $0x60] sm:$0xff]
    %v88 = vld [vmem:[#allocation3 + $0x68] sm:$0xff]
    %v89 = vld [vmem:[#allocation3 + $0x70] sm:$0xff]
    %v90 = vld [vmem:[#allocation3 + $0x78] sm:$0xff]
    %v91 = vld [vmem:[%s4] sm:$0x1]
    %v93 = vperm.slane %v91, 0
    %95 = vmatpush.msra.mxu0 %v90
    %96 = vmatpush.msra.mxu0 %v89
    %97 = vmatpush.msra.mxu0 %v88
    %98 = vmatpush.msra.mxu0 %v87
    %99 = vmatpush.msra.mxu0 %v86
    %100 = vmatpush.msra.mxu0 %v85
    %101 = vmatpush.msra.mxu0 %v84
    %102 = vmatpush.msra.mxu0 %v83
    %103 = vmatpush.msra.mxu0 %v82
    %104 = vmatpush.msra.mxu0 %v81
    %105 = vmatpush.msra.mxu0 %v80
    %106 = vmatpush.msra.mxu0 %v79
    %107 = vmatpush.msra.mxu0 %v78
    %108 = vmatpush.msra.mxu0 %v77
    %109 = vmatpush.msra.mxu0 %v76
    %110 = vmatpush.msra.mxu0 %v75
    %111 = vmatmul.f32.gmra.mxu0 %v74
    %v112 = vpop.f32.mrf.mxu0
    %v113 = vadd.f32 %v93, %v112
    %114 = vdwg.mxu0
    %v115 = vmax.f32 %v113, 0.0
    %v116 = vld [vmem:[%s5] sm:$0x1]
    %v118 = vperm.slane %v116, 0
    %v120 = vmul.f32 %v115, %v118
    %121 = vadd.xlane.f32.xlu0 %v120
    %v122 = vpop.xlane.xlu0 %121
    %s123 = sld [smem:[#allocation2]]
    %v124 = vstv %s123
    %v125 = vadd.f32 %v122, %v124
    %v127 = vlaneseq
    %v128 = vand.u32 %v127, 127
    %v129 = vperm.slane %v125, %v128
    %vm131 = vcmask 57344
    %132 = vst.msk [vmem:[#allocation6] sm:$0x1] %vm131, %v129
    // Predicated region
    $region34: #{critic_forward.1} parent=1 // pred_check
      _
    $region35: #{critic_forward.1} parent=1 // pred_check_branch
      %134 = sbr.rel (0) target = $region37
    $region36: #{critic_forward.1} parent=1 // pred_region
      %136 = vsyncadd [#allocation5], 0
      %s138 = sshll.u32 [#allocation6], 4
      %s139 = int_to_ptr.vmem [resolvable:$true] %s138
      %s140 = sshll.u32 %s7, 4
      %s141 = int_to_ptr.hbm [resolvable:$true] %s140
      %143 = dma.vmem_to_hbm [thread:$0]  %s139, 16, %s141, [#allocation5]
    $region37: #{critic_forward.1} parent=1 // pred_fallthru
      _
    // Predicated region
    $region38: #{critic_forward.1} parent=1 // pred_check
      _
    $region39: #{critic_forward.1} parent=1 // pred_check_branch
      %145 = sbr.rel (0) target = $region41
    $region40: #{critic_forward.1} parent=1 // pred_region
      %147 = dma.done [#allocation5], 16
    $region41: #{critic_forward.1} parent=1 // pred_fallthru
      _
    %148 = vsyncpa [#allocation4], 1
    %149 = vsyncpa [#allocation5], 1

</llo_original>
